<compile_context>
chip_gen: v6e
topology: v6e:2x2x1
jax: 0.10.0
libtpu: 0.0.40
codegen_flags: <defaults>
</compile_context>

<pallas_src>
import functools

import jax
import jax.numpy as jnp
from jax import lax
from jax.experimental import pallas as pl
from jax.experimental.pallas import tpu as pltpu


def _patch_expand_kernel(x_ref, w_ref, g_ref, b_ref, o_ref, *, cq, eps, mxu_dtype):
    # x_ref: (TL, D)        row tile of the input sequence (TL = TH * W)
    # w_ref: (2, D, D)      per-p1 halves of W_expand^T (resident in VMEM)
    # g_ref/b_ref: (1, D)   LayerNorm gamma/beta tiled over the two p2 groups
    # o_ref: (TH, W, D)     output tile in the final rearranged layout
    p1 = pl.program_id(2)

    x = x_ref[...]
    if x.dtype != mxu_dtype:
        x = x.astype(mxu_dtype)
    w = w_ref[p1]                                               # (D, D)
    y = jnp.dot(x, w, preferred_element_type=jnp.float32)       # (TL, D) f32, MXU

    d = y.shape[-1]                                             # = dim = 2 * cq
    # Lane mask selecting the first LayerNorm group (p2 == 0).
    m0 = (lax.broadcasted_iota(jnp.int32, (1, d), 1) < cq).astype(jnp.float32)

    # Two-group LayerNorm: E[y^2] - mean^2 -> only 4 lane reductions and no
    # separate centered/squared full-width passes (smaller live f32 footprint).
    inv = 1.0 / cq
    y2 = y * y
    s_all = jnp.sum(y, axis=-1, keepdims=True)                  # (TL, 1)
    s0 = jnp.sum(y * m0, axis=-1, keepdims=True)
    q_all = jnp.sum(y2, axis=-1, keepdims=True)
    q0 = jnp.sum(y2 * m0, axis=-1, keepdims=True)

    mean0 = s0 * inv
    mean1 = (s_all - s0) * inv
    var0 = q0 * inv - mean0 * mean0
    var1 = (q_all - q0) * inv - mean1 * mean1
    rstd0 = lax.rsqrt(var0 + eps)
    rstd1 = lax.rsqrt(var1 + eps)

    # Broadcast per-row group stats back to full lane width via the mask.
    mean = mean1 + (mean0 - mean1) * m0                         # (TL, D)
    rstd = rstd1 + (rstd0 - rstd1) * m0                         # (TL, D)

    scale = rstd * g_ref[...]                                   # gamma folded into rstd
    out = (y - mean) * scale + b_ref[...]                       # (TL, D) f32

    # Single full-width store.  When W is a multiple of the sublane packing the
    # reshape is a free metadata change; for W = 7/14/28 Mosaic inserts a
    # sublane relayout before the store (perf-only, still correct).
    # TODO(synk): for non-sublane-aligned W, store from a packed (TL, D) VMEM
    # scratch via a manual strided DMA to a pl.ANY output to avoid the relayout.
    o_ref[...] = out.reshape(o_ref.shape).astype(o_ref.dtype)


def _vmem_limit_bytes():
    """Per-generation scoped-VMEM limit: v7x has 64 MiB/TC, v5e/v6e have 128 MiB."""
    try:
        kind = jax.devices()[0].device_kind.lower()
    except Exception:
        kind = ""
    if "v7" in kind or "7x" in kind:
        return 48 * 1024 * 1024
    return 64 * 1024 * 1024


def _pick_th(H, W, D, x_bytes, out_bytes, mxu_bytes, target_rows, vmem_budget):
    """Largest divisor TH of H whose (TH*W, D) tile fits target_rows and VMEM."""
    divisors = [d for d in range(1, H + 1) if H % d == 0]
    aligned = [d for d in divisors if (d * W) % 8 == 0] or divisors

    def vmem_bytes(th):
        tl = th * W
        x_buf = 2 * tl * D * x_bytes         # double-buffered input row tile
        o_buf = 2 * tl * D * out_bytes       # double-buffered output tile
        w_buf = 2 * D * D * mxu_bytes        # weight, single-buffered (Buffered(1))
        temps = 6 * tl * D * 4               # live f32 temporaries (y, y2, masked, out, ...)
        return x_buf + o_buf + w_buf + temps

    fitting = [d for d in aligned
               if d * W <= target_rows and vmem_bytes(d) <= vmem_budget]
    if fitting:
        return max(fitting)
    return min(aligned)


def prepare_patch_expand_params(w_expand, gamma, beta, mxu_dtype):
    """One-time parameter preprocessing (hoist to parameter-load time).

    w_expand: (2*dim, dim) nn.Linear(dim, 2*dim, bias=False) weight
    gamma, beta: (dim // 2,) LayerNorm affine parameters
    Returns (w3, g2, b2) ready for patch_expand_prepared().
    """
    two_d, D = w_expand.shape
    assert two_d == 2 * D
    # Per-p1 halves of W_expand^T in the MXU operand dtype.
    w3 = jnp.transpose(w_expand.reshape(2, D, D), (0, 2, 1)).astype(mxu_dtype)
    # gamma/beta tiled over the two p2 groups -> applied with one full-width op.
    g2 = jnp.tile(gamma.astype(jnp.float32), 2).reshape(1, D)
    b2 = jnp.tile(beta.astype(jnp.float32), 2).reshape(1, D)
    return w3, g2, b2


def patch_expand_prepared(x, w3, g2, b2, H, W, eps=1e-5, target_rows=2048):
    """Run the PatchExpand kernel with pre-processed parameters."""
    B, L, D = x.shape
    assert L == H * W, "input feature has wrong size"
    assert D % 2 == 0 and w3.shape == (2, D, D)
    cq = D // 2
    mxu_dtype = w3.dtype

    vmem_limit = _vmem_limit_bytes()
    vmem_budget = vmem_limit - 8 * 1024 * 1024
    TH = _pick_th(H, W, D,
                  jnp.dtype(x.dtype).itemsize, jnp.dtype(x.dtype).itemsize,
                  jnp.dtype(mxu_dtype).itemsize, target_rows, vmem_budget)
    TL = TH * W
    n_h = H // TH

    kernel = functools.partial(_patch_expand_kernel, cq=cq, eps=eps,
                               mxu_dtype=mxu_dtype)

    # (B, H, 2, W, D) flattens row-major to the rearranged (B, 4L, D//2).
    expanded = pl.pallas_call(
        kernel,
        out_shape=jax.ShapeDtypeStruct((B, H, 2, W, D), x.dtype),
        grid_spec=pltpu.PrefetchScalarGridSpec(
            num_scalar_prefetch=0,
            grid=(B, n_h, 2),                        # p1 innermost: x tile reused
            in_specs=[
                # x row tile; same block index for p1 = 0 / 1 -> fetched once per tile.
                pl.BlockSpec((pl.Squeezed(), TL, D), lambda b, h, p1: (b, h, 0)),
                # Constant-index operands: DMA'd once, single-buffered to save VMEM.
                pl.BlockSpec((2, D, D), lambda b, h, p1: (0, 0, 0),
                             pipeline_mode=pl.Buffered(1)),
                pl.BlockSpec((1, D), lambda b, h, p1: (0, 0),
                             pipeline_mode=pl.Buffered(1)),
                pl.BlockSpec((1, D), lambda b, h, p1: (0, 0),
                             pipeline_mode=pl.Buffered(1)),
            ],
            out_specs=pl.BlockSpec(
                (pl.Squeezed(), TH, pl.Squeezed(), W, D),
                lambda b, h, p1: (b, h, p1, 0, 0)),
        ),
        compiler_params=pltpu.CompilerParams(
            # p1 writes disjoint output blocks and only reads x, so it is safe to
            # shard; gives v7x's two TensorCores work even at batch 1 / small H.
            dimension_semantics=("parallel", "parallel", "parallel"),
            vmem_limit_bytes=vmem_limit),
    )(x, w3, g2, b2)

    return expanded.reshape(B, 4 * L, cq)


def patch_expand(x, w_expand, gamma, beta, H, W, eps=1e-5, mxu_dtype=None,
                 target_rows=2048):
    """SwinUnet PatchExpand forward.

    x:        (B, L, dim) with L = H * W
    w_expand: (2*dim, dim) -- PyTorch nn.Linear(dim, 2*dim, bias=False) weight
    gamma, beta: (dim // 2,) LayerNorm affine parameters
    returns:  (B, 4*L, dim // 2) in x.dtype (note: PyTorch LayerNorm returns f32;
              here the result is cast back to the activation dtype).
    """
    if mxu_dtype is None:
        mxu_dtype = x.dtype          # no silent downcast of f32 activations
    w3, g2, b2 = prepare_patch_expand_params(w_expand, gamma, beta, mxu_dtype)
    return patch_expand_prepared(x, w3, g2, b2, H, W, eps=eps,
                                 target_rows=target_rows)


def _reference(x, w_expand, gamma, beta, H, W, eps=1e-5):
    # Pure-JAX (f32) reference matching the PyTorch module.
    x = x.astype(jnp.float32)
    w = w_expand.astype(jnp.float32)
    B, L, D = x.shape
    y = jnp.einsum('blc,oc->blo', x, w)                  # Linear, no bias
    C = 2 * D
    cq = C // 4
    y = y.reshape(B, H, W, 2, 2, cq)
    y = jnp.transpose(y, (0, 1, 3, 2, 4, 5)).reshape(B, 4 * L, cq)
    mean = jnp.mean(y, axis=-1, keepdims=True)
    var = jnp.mean((y - mean) ** 2, axis=-1, keepdims=True)
    return ((y - mean) * lax.rsqrt(var + eps) * gamma.astype(jnp.float32)
            + beta.astype(jnp.float32))


if __name__ == "__main__":
    key = jax.random.PRNGKey(0)
    B, H, W, dim = 2, 8, 8, 64
    L = H * W

    k1, k2, k3, k4 = jax.random.split(key, 4)
    # Typical activations/weights are bf16; reference upcasts the same values.
    x = jax.random.normal(k1, (B, L, dim), dtype=jnp.float32).astype(jnp.bfloat16)
    w_expand = (0.05 * jax.random.normal(k2, (2 * dim, dim), dtype=jnp.float32)
                ).astype(jnp.bfloat16)
    gamma = 1.0 + 0.1 * jax.random.normal(k3, (dim // 2,), dtype=jnp.float32)
    beta = 0.1 * jax.random.normal(k4, (dim // 2,), dtype=jnp.float32)

    # Parameter preprocessing hoisted out of the per-call path.
    w3, g2, b2 = prepare_patch_expand_params(w_expand, gamma, beta, x.dtype)
    out = patch_expand_prepared(x, w3, g2, b2, H, W)
    out = jax.block_until_ready(out)

    ref = _reference(x, w_expand, gamma, beta, H, W)
    assert out.shape == (B, 4 * L, dim // 2)
    assert out.dtype == x.dtype
    # bf16 output quantization -> loosened tolerance.
    assert jnp.allclose(out.astype(jnp.float32), ref, atol=3e-2, rtol=3e-2)

    print("KERNEL_OK")
</pallas_src>

<mosaic_0001>
module attributes {stable_mosaic.version = 11 : i64} {
  func.func @_patch_expand_kernel(%arg0: i32, %arg1: i32, %arg2: i32, %arg3: memref<1x64x64xbf16, #tpu.memory_space<vmem>>, %arg4: memref<2x64x64xbf16, #tpu.memory_space<vmem>>, %arg5: memref<1x64xf32, #tpu.memory_space<vmem>>, %arg6: memref<1x64xf32, #tpu.memory_space<vmem>>, %arg7: memref<1x8x1x8x64xbf16, #tpu.memory_space<vmem>>) attributes {dimension_semantics = [#tpu.dimension_semantics<parallel>, #tpu.dimension_semantics<parallel>, #tpu.dimension_semantics<parallel>], iteration_bounds = array<i64: 2, 1, 2>, scalar_prefetch = 0 : i64, scratch_operands = 0 : i64, tpu.core_type = #tpu.core_type<tc>, window_params = [{transform_indices = @transform_0, window_bounds = array<i64: 1, 64, 64>}, {pipeline_mode = #tpu.pipeline_mode<synchronous>, transform_indices = @transform_1, window_bounds = array<i64: 2, 64, 64>}, {pipeline_mode = #tpu.pipeline_mode<synchronous>, transform_indices = @transform_2, window_bounds = array<i64: 1, 64>}, {pipeline_mode = #tpu.pipeline_mode<synchronous>, transform_indices = @transform_3, window_bounds = array<i64: 1, 64>}, {transform_indices = @transform_4, window_bounds = array<i64: 1, 8, 1, 8, 64>}]} {
    %c0 = arith.constant 0 : index
    %c0_0 = arith.constant 0 : index
    %c0_1 = arith.constant 0 : index
    %0 = vector.load %arg3[%c0, %c0_0, %c0_1] : memref<1x64x64xbf16, #tpu.memory_space<vmem>>, vector<1x64x64xbf16>
    %1 = vector.shape_cast %0 : vector<1x64x64xbf16> to vector<64x64xbf16>
    %2 = arith.index_cast %arg2 : i32 to index
    %c0_2 = arith.constant 0 : index
    %c0_3 = arith.constant 0 : index
    %3 = vector.load %arg4[%2, %c0_2, %c0_3] : memref<2x64x64xbf16, #tpu.memory_space<vmem>>, vector<1x64x64xbf16>
    %4 = vector.shape_cast %3 : vector<1x64x64xbf16> to vector<64x64xbf16>
    %cst = arith.constant dense<0.000000e+00> : vector<64x64xf32>
    %5 = tpu.matmul %1, %4, %cst {dimension_numbers = #tpu.dot_dimension_numbers<[1], [0], [0], [1], [0, 0, 1, 1], [], []>} : vector<64x64xbf16>, vector<64x64xbf16>, vector<64x64xf32> -> vector<64x64xf32>
    %6 = tpu.iota {dimensions = array<i32: 1>} : vector<1x64xi32>
    %c32_i32 = arith.constant 32 : i32
    %7 = vector.broadcast %c32_i32 : i32 to vector<1x64xi32>
    %8 = arith.cmpi slt, %6, %7 : vector<1x64xi32>
    %9 = arith.extui %8 : vector<1x64xi1> to vector<1x64xi32>
    %10 = arith.sitofp %9 : vector<1x64xi32> to vector<1x64xf32>
    %11 = arith.mulf %5, %5 : vector<64x64xf32>
    %cst_4 = arith.constant dense<0.000000e+00> : vector<64xf32>
    %12 = vector.multi_reduction <add>, %5, %cst_4 [1] : vector<64x64xf32> to vector<64xf32>
    %13 = vector.shape_cast %12 : vector<64xf32> to vector<64x1xf32>
    %14 = vector.broadcast %10 : vector<1x64xf32> to vector<64x64xf32>
    %15 = arith.mulf %5, %14 : vector<64x64xf32>
    %cst_5 = arith.constant dense<0.000000e+00> : vector<64xf32>
    %16 = vector.multi_reduction <add>, %15, %cst_5 [1] : vector<64x64xf32> to vector<64xf32>
    %17 = vector.shape_cast %16 : vector<64xf32> to vector<64x1xf32>
    %cst_6 = arith.constant dense<0.000000e+00> : vector<64xf32>
    %18 = vector.multi_reduction <add>, %11, %cst_6 [1] : vector<64x64xf32> to vector<64xf32>
    %19 = vector.shape_cast %18 : vector<64xf32> to vector<64x1xf32>
    %20 = vector.broadcast %10 : vector<1x64xf32> to vector<64x64xf32>
    %21 = arith.mulf %11, %20 : vector<64x64xf32>
    %cst_7 = arith.constant dense<0.000000e+00> : vector<64xf32>
    %22 = vector.multi_reduction <add>, %21, %cst_7 [1] : vector<64x64xf32> to vector<64xf32>
    %23 = vector.shape_cast %22 : vector<64xf32> to vector<64x1xf32>
    %cst_8 = arith.constant 3.125000e-02 : f32
    %24 = vector.broadcast %cst_8 : f32 to vector<64x1xf32>
    %25 = arith.mulf %17, %24 : vector<64x1xf32>
    %26 = arith.subf %13, %17 : vector<64x1xf32>
    %cst_9 = arith.constant 3.125000e-02 : f32
    %27 = vector.broadcast %cst_9 : f32 to vector<64x1xf32>
    %28 = arith.mulf %26, %27 : vector<64x1xf32>
    %cst_10 = arith.constant 3.125000e-02 : f32
    %29 = vector.broadcast %cst_10 : f32 to vector<64x1xf32>
    %30 = arith.mulf %23, %29 : vector<64x1xf32>
    %31 = arith.mulf %25, %25 : vector<64x1xf32>
    %32 = arith.subf %30, %31 : vector<64x1xf32>
    %33 = arith.subf %19, %23 : vector<64x1xf32>
    %cst_11 = arith.constant 3.125000e-02 : f32
    %34 = vector.broadcast %cst_11 : f32 to vector<64x1xf32>
    %35 = arith.mulf %33, %34 : vector<64x1xf32>
    %36 = arith.mulf %28, %28 : vector<64x1xf32>
    %37 = arith.subf %35, %36 : vector<64x1xf32>
    %cst_12 = arith.constant 9.99999974E-6 : f32
    %38 = vector.broadcast %cst_12 : f32 to vector<64x1xf32>
    %39 = arith.addf %32, %38 : vector<64x1xf32>
    %40 = math.rsqrt %39 : vector<64x1xf32>
    %cst_13 = arith.constant 9.99999974E-6 : f32
    %41 = vector.broadcast %cst_13 : f32 to vector<64x1xf32>
    %42 = arith.addf %37, %41 : vector<64x1xf32>
    %43 = math.rsqrt %42 : vector<64x1xf32>
    %44 = arith.subf %25, %28 : vector<64x1xf32>
    %45 = vector.broadcast %44 : vector<64x1xf32> to vector<64x64xf32>
    %46 = vector.broadcast %10 : vector<1x64xf32> to vector<64x64xf32>
    %47 = arith.mulf %45, %46 : vector<64x64xf32>
    %48 = vector.broadcast %28 : vector<64x1xf32> to vector<64x64xf32>
    %49 = arith.addf %48, %47 : vector<64x64xf32>
    %50 = arith.subf %40, %43 : vector<64x1xf32>
    %51 = vector.broadcast %50 : vector<64x1xf32> to vector<64x64xf32>
    %52 = vector.broadcast %10 : vector<1x64xf32> to vector<64x64xf32>
    %53 = arith.mulf %51, %52 : vector<64x64xf32>
    %54 = vector.broadcast %43 : vector<64x1xf32> to vector<64x64xf32>
    %55 = arith.addf %54, %53 : vector<64x64xf32>
    %c0_14 = arith.constant 0 : index
    %c0_15 = arith.constant 0 : index
    %56 = vector.load %arg5[%c0_14, %c0_15] : memref<1x64xf32, #tpu.memory_space<vmem>>, vector<1x64xf32>
    %57 = vector.broadcast %56 : vector<1x64xf32> to vector<64x64xf32>
    %58 = arith.mulf %55, %57 : vector<64x64xf32>
    %59 = arith.subf %5, %49 : vector<64x64xf32>
    %60 = arith.mulf %59, %58 : vector<64x64xf32>
    %c0_16 = arith.constant 0 : index
    %c0_17 = arith.constant 0 : index
    %61 = vector.load %arg6[%c0_16, %c0_17] : memref<1x64xf32, #tpu.memory_space<vmem>>, vector<1x64xf32>
    %62 = vector.broadcast %61 : vector<1x64xf32> to vector<64x64xf32>
    %63 = arith.addf %60, %62 : vector<64x64xf32>
    %64 = vector.shape_cast %63 : vector<64x64xf32> to vector<8x8x64xf32>
    %65 = arith.truncf %64 : vector<8x8x64xf32> to vector<8x8x64xbf16>
    %c0_18 = arith.constant 0 : index
    %c0_19 = arith.constant 0 : index
    %c0_20 = arith.constant 0 : index
    %c0_21 = arith.constant 0 : index
    %c0_22 = arith.constant 0 : index
    %66 = vector.load %arg7[%c0_18, %c0_19, %c0_20, %c0_21, %c0_22] : memref<1x8x1x8x64xbf16, #tpu.memory_space<vmem>>, vector<1x8x1x8x64xbf16>
    %67 = vector.shape_cast %66 : vector<1x8x1x8x64xbf16> to vector<8x8x64xbf16>
    %68 = vector.shape_cast %65 : vector<8x8x64xbf16> to vector<1x8x1x8x64xbf16>
    tpu.vector_store %arg7[%c0_18, %c0_19, %c0_20, %c0_21, %c0_22], %68 {strides = array<i32>} : memref<1x8x1x8x64xbf16, #tpu.memory_space<vmem>>, vector<1x8x1x8x64xbf16>,
    return
  }
  func.func @transform_0(%arg0: i32, %arg1: i32, %arg2: i32) -> (i32, i32, i32) {
    %c0_i32 = arith.constant 0 : i32
    %c0_i32_0 = arith.constant 0 : i32
    return %arg0, %arg1, %c0_i32 : i32, i32, i32
  }
  func.func @transform_1(%arg0: i32, %arg1: i32, %arg2: i32) -> (i32, i32, i32) {
    %c0_i32 = arith.constant 0 : i32
    %c0_i32_0 = arith.constant 0 : i32
    %c0_i32_1 = arith.constant 0 : i32
    %c0_i32_2 = arith.constant 0 : i32
    return %c0_i32, %c0_i32_0, %c0_i32_1 : i32, i32, i32
  }
  func.func @transform_2(%arg0: i32, %arg1: i32, %arg2: i32) -> (i32, i32) {
    %c0_i32 = arith.constant 0 : i32
    %c0_i32_0 = arith.constant 0 : i32
    %c0_i32_1 = arith.constant 0 : i32
    return %c0_i32, %c0_i32_0 : i32, i32
  }
  func.func @transform_3(%arg0: i32, %arg1: i32, %arg2: i32) -> (i32, i32) {
    %c0_i32 = arith.constant 0 : i32
    %c0_i32_0 = arith.constant 0 : i32
    %c0_i32_1 = arith.constant 0 : i32
    return %c0_i32, %c0_i32_0 : i32, i32
  }
  func.func @transform_4(%arg0: i32, %arg1: i32, %arg2: i32) -> (i32, i32, i32, i32, i32) {
    %c0_i32 = arith.constant 0 : i32
    %c0_i32_0 = arith.constant 0 : i32
    %c0_i32_1 = arith.constant 0 : i32
    return %arg0, %arg1, %arg2, %c0_i32, %c0_i32_0 : i32, i32, i32, i32, i32
  }
}

</mosaic_0001>

<llo_original>
// kernel: tpu_custom_call.1
$region0: #{tpu_custom_call.1}
  #allocation0 [shape = 'u32[]', space=smem, size = 0x4, offset = 0x4, fixed_abs, tag = 'smem constant byte address 0x4 - core index']
  #allocation1 [shape = 'u32[144,128]{1,0:T(1,128)}', space=vmem, size = 0x12000, scoped, tag = 'internal scratch']
  %s0 = inlined_call_operand.hbm [shape: bf16[2,64,64], index: 0, kind: input, shape index: {}]
  %s1 = inlined_call_operand.hbm [shape: bf16[2,64,64], index: 1, kind: input, shape index: {}]
  %s2 = inlined_call_operand.vmem [shape: f32[1,64], index: 2, kind: input, shape index: {}]
  %s3 = inlined_call_operand.vmem [shape: f32[1,64], index: 3, kind: input, shape index: {}]
  %s4 = inlined_call_operand.hbm [shape: bf16[2,8,2,8,64], index: 4, kind: output, shape index: {}]
  %s5 = sld [smem:[#allocation0]]
  $region57: #{tpu_custom_call.1} parent=0
    _
  %s7 = ssub.s32 1, %s5
  %s8 = scalar_select 0, %s7, %s5
  $region1: #{tpu_custom_call.1} parent=0
    #allocation2 [shape = 'u8[32768]{0}', space=vmem, size = 0x8000, scoped, tag = 'input window, operand 0']
    #allocation3 [shape = 's32[2]{0}', space=sflag, size = 0x8, scoped, tag = 'scoped memory for tpu_custom_call.1']
    #allocation4 [shape = 's32[2]{0}', space=sflag, size = 0x8, scoped, tag = 'scoped memory for tpu_custom_call.1']
    #allocation5 [shape = 'u8[32768]{0}', space=vmem, size = 0x8000, scoped, tag = 'input window, operand 1, single buffered']
    #allocation6 [shape = 's32[1]{0}', space=sflag, size = 0x4, scoped, tag = 'scoped memory for tpu_custom_call.1']
    #allocation7 [shape = 'u8[32768]{0}', space=vmem, size = 0x8000, scoped, tag = 'output window, operand 0']
    %9 = vsyncpa [#allocation3], 0
    %s10 = scalar_lea.sflag [#allocation3], 1
    %11 = vsyncpa %s10, 0
    %12 = vsyncpa [#allocation6], 0
    %13 = vsyncpa [#allocation4], 0
    %s14 = scalar_lea.sflag [#allocation4], 1
    %15 = vsyncpa %s14, 0
    loop: start=0, step=1, limit=6
    $region2: #{tpu_custom_call.1} parent=1 // loop_pre_header
      _
    $region3: #{tpu_custom_call.1} parent=1 // loop_header
      %s17 = sphi 0, %s21
      %p18 = scmp.ge.s32.totalorder %s17, 6
      %s24 = sphi 0, %s43
      %s25 = sphi 0, %s39
      %s26 = sphi 0, %s35
      %s27 = sphi 0, %s24
      %s28 = sphi 0, %s25
      %s29 = sphi 0, %s26
      %s30 = sphi 0, %s27
      %s31 = sphi 0, %s28
      %s32 = sphi 0, %s29
      %s48 = sphi 0, %s50
      %s51 = sphi 0, %s48
      %s52 = sphi 0, %s51
      %s68 = sphi 0, %s52
      %s72 = sphi 0, %s72
      %s74 = sphi 0, %s72
      %s75 = sphi 0, %s74
      %s89 = sphi 0, %s75
      %s93 = sphi 0, %s93
      %s95 = sphi 0, %s93
      %s96 = sphi 0, %s95
      %s110 = sphi 0, %s96
      %s114 = sphi 0, %s114
      %s116 = sphi 0, %s114
      %s117 = sphi 0, %s116
      %s131 = sphi 0, %s117
      %s141 = sphi 0, %s143
      %s144 = sphi 0, %s141
      %s145 = sphi 0, %s144
      %s161 = sphi 0, %s145
    $region4: #{tpu_custom_call.1} parent=1 // loop_header_branch
      %20 = sbr.rel (%p18) target = $region8
    $region5: #{tpu_custom_call.1} parent=1 // loop_body
      %s22 = ssub.s32 %s17, 1
      %s23 = ssub.s32 %s17, 2
      %s33 = sadd.s32 1, %s26
      %p34 = scmp.ge.s32.totalorder %s33, 2
      %s35 = scalar_select %p34, 0, %s33
      %s36 = sadd.s32 1, %s25
      %s37 = scalar_select %p34, %s36, %s25
      %p38 = scmp.ge.s32.totalorder %s37, 1
      %s39 = scalar_select %p38, 0, %s37
      %s40 = sadd.s32 1, %s24
      %s41 = scalar_select %p38, %s40, %s24
      %p42 = scmp.ge.s32.totalorder %s41, 2
      %s43 = scalar_select %p42, 0, %s41
      %s44 = ssub.s32 %s24, %s43
      %s45 = ssub.s32 %s25, %s39
      %s46 = sor.u32 %s44, %s45
      %p47 = scmp.eq.s32.totalorder %s46, 0
      %s49 = sadd.s32 %s48, 1
      %s50 = scalar_select %p47, %s48, %s49
      %p53 = pneg %p47
      %p54 = scmp.eq.s32.totalorder %s17, 3
      %p55 = por %p53, %p54
      %p56 = scmp.ne.s32.totalorder %s48, %s51
      %p57 = scmp.eq.s32.totalorder %s17, 0
      %p58 = por %p56, %p57
      %p59 = scmp.ne.s32.totalorder %s48, %s51
      %p60 = scmp.eq.s32.totalorder %s22, 3
      %p61 = por %p59, %p60
      %p62 = scmp.ne.s32.totalorder %s51, %s52
      %p63 = scmp.eq.s32.totalorder %s22, 0
      %p64 = por %p62, %p63
      %p65 = scmp.ne.s32.totalorder %s51, %s52
      %p66 = scmp.eq.s32.totalorder %s23, 3
      %p67 = por %p65, %p66
      %p69 = scmp.ne.s32.totalorder %s52, %s68
      %p70 = scmp.eq.s32.totalorder %s23, 0
      %p71 = por %p69, %p70
      %s73 = sadd.s32 %s72, 1
      %p76 = scmp.eq.s32.totalorder %s17, 3
      %p77 = scmp.ne.s32.totalorder %s72, %s74
      %p78 = scmp.eq.s32.totalorder %s17, 0
      %p79 = por %p77, %p78
      %p80 = scmp.ne.s32.totalorder %s72, %s74
      %p81 = scmp.eq.s32.totalorder %s22, 3
      %p82 = por %p80, %p81
      %p83 = scmp.ne.s32.totalorder %s74, %s75
      %p84 = scmp.eq.s32.totalorder %s22, 0
      %p85 = por %p83, %p84
      %p86 = scmp.ne.s32.totalorder %s74, %s75
      %p87 = scmp.eq.s32.totalorder %s23, 3
      %p88 = por %p86, %p87
      %p90 = scmp.ne.s32.totalorder %s75, %s89
      %p91 = scmp.eq.s32.totalorder %s23, 0
      %p92 = por %p90, %p91
      %s94 = sadd.s32 %s93, 1
      %p97 = scmp.eq.s32.totalorder %s17, 3
      %p98 = scmp.ne.s32.totalorder %s93, %s95
      %p99 = scmp.eq.s32.totalorder %s17, 0
      %p100 = por %p98, %p99
      %p101 = scmp.ne.s32.totalorder %s93, %s95
      %p102 = scmp.eq.s32.totalorder %s22, 3
      %p103 = por %p101, %p102
      %p104 = scmp.ne.s32.totalorder %s95, %s96
      %p105 = scmp.eq.s32.totalorder %s22, 0
      %p106 = por %p104, %p105
      %p107 = scmp.ne.s32.totalorder %s95, %s96
      %p108 = scmp.eq.s32.totalorder %s23, 3
      %p109 = por %p107, %p108
      %p111 = scmp.ne.s32.totalorder %s96, %s110
      %p112 = scmp.eq.s32.totalorder %s23, 0
      %p113 = por %p111, %p112
      %s115 = sadd.s32 %s114, 1
      %p118 = scmp.eq.s32.totalorder %s17, 3
      %p119 = scmp.ne.s32.totalorder %s114, %s116
      %p120 = scmp.eq.s32.totalorder %s17, 0
      %p121 = por %p119, %p120
      %p122 = scmp.ne.s32.totalorder %s114, %s116
      %p123 = scmp.eq.s32.totalorder %s22, 3
      %p124 = por %p122, %p123
      %p125 = scmp.ne.s32.totalorder %s116, %s117
      %p126 = scmp.eq.s32.totalorder %s22, 0
      %p127 = por %p125, %p126
      %p128 = scmp.ne.s32.totalorder %s116, %s117
      %p129 = scmp.eq.s32.totalorder %s23, 3
      %p130 = por %p128, %p129
      %p132 = scmp.ne.s32.totalorder %s117, %s131
      %p133 = scmp.eq.s32.totalorder %s23, 0
      %p134 = por %p132, %p133
      %s135 = ssub.s32 %s24, %s43
      %s136 = ssub.s32 %s25, %s39
      %s137 = sor.u32 %s135, %s136
      %s138 = ssub.s32 %s26, %s35
      %s139 = sor.u32 %s137, %s138
      %p140 = scmp.eq.s32.totalorder %s139, 0
      %s142 = sadd.s32 %s141, 1
      %s143 = scalar_select %p140, %s141, %s142
      %p146 = pneg %p140
      %p147 = scmp.eq.s32.totalorder %s17, 3
      %p148 = por %p146, %p147
      %p149 = scmp.ne.s32.totalorder %s141, %s144
      %p150 = scmp.eq.s32.totalorder %s17, 0
      %p151 = por %p149, %p150
      %p152 = scmp.ne.s32.totalorder %s141, %s144
      %p153 = scmp.eq.s32.totalorder %s22, 3
      %p154 = por %p152, %p153
      %p155 = scmp.ne.s32.totalorder %s144, %s145
      %p156 = scmp.eq.s32.totalorder %s22, 0
      %p157 = por %p155, %p156
      %p158 = scmp.ne.s32.totalorder %s144, %s145
      %p159 = scmp.eq.s32.totalorder %s23, 3
      %p160 = por %p158, %p159
      %p162 = scmp.ne.s32.totalorder %s145, %s161
      %p163 = scmp.eq.s32.totalorder %s23, 0
      %p164 = por %p162, %p163
      %p165 = scmp.le.s32.totalorder 1, %s17
      %p166 = scmp.lt.s32.totalorder %s17, 5
      %p167 = pnand %p165, %p166
      %p168 = pneg %p167
      // Predicated region
      $region9: #{tpu_custom_call.1} parent=5 // pred_check
        _
      $region10: #{tpu_custom_call.1} parent=5 // pred_check_branch
        %170 = sbr.rel (%p167) target = $region12
      $region11: #{tpu_custom_call.1} parent=5 // pred_region
        %s171 = ssub.s32 %s17, 1
        // Predicated region
        $region13: #{tpu_custom_call.1} parent=11 // pred_check
          %p172 = pneg %p85
        $region14: #{tpu_custom_call.1} parent=11 // pred_check_branch
          %174 = sbr.rel (%p172) target = $region16
        $region15: #{tpu_custom_call.1} parent=11 // pred_region
          %s176 = ssub.s32 1024, 1024
          %177 = vsyncadd [#allocation6], %s176
          %s178 = sshll.u32 [#allocation5], 4
          %s179 = int_to_ptr.vmem [resolvable:$true] %s178
          %184 = dma.hbm_to_vmem [thread:$0]  %s1, 1024, %s179, [#allocation6], 64, 64, 4
        $region16: #{tpu_custom_call.1} parent=11 // pred_fallthru
          _
        // Predicated region
        $region17: #{tpu_custom_call.1} parent=11 // pred_check
          %p185 = pneg %p106
        $region18: #{tpu_custom_call.1} parent=11 // pred_check_branch
          %187 = sbr.rel (%p185) target = $region20
        $region19: #{tpu_custom_call.1} parent=11 // pred_region
          _
        $region20: #{tpu_custom_call.1} parent=11 // pred_fallthru
          _
        // Predicated region
        $region21: #{tpu_custom_call.1} parent=11 // pred_check
          %p188 = pneg %p127
        $region22: #{tpu_custom_call.1} parent=11 // pred_check_branch
          %190 = sbr.rel (%p188) target = $region24
        $region23: #{tpu_custom_call.1} parent=11 // pred_region
          _
        $region24: #{tpu_custom_call.1} parent=11 // pred_fallthru
          _
      $region12: #{tpu_custom_call.1} parent=5 // pred_fallthru
        _
      %p191 = scmp.lt.s32.totalorder %s17, 4
      // Predicated region
      $region25: #{tpu_custom_call.1} parent=5 // pred_check
        %p192 = pneg %p191
      $region26: #{tpu_custom_call.1} parent=5 // pred_check_branch
        %194 = sbr.rel (%p192) target = $region28
      $region27: #{tpu_custom_call.1} parent=5 // pred_region
        // Predicated region
        $region29: #{tpu_custom_call.1} parent=27 // pred_check
          %p195 = pneg %p58
        $region30: #{tpu_custom_call.1} parent=27 // pred_check_branch
          %197 = sbr.rel (%p195) target = $region32
        $region31: #{tpu_custom_call.1} parent=27 // pred_region
          %s198 = sand.u32 %s48, 1
          %s199 = scalar_lea.sflag [#allocation3], %s198
          %s200 = sand.u32 %s48, 1
          %s201 = smul.addr %s200, 32
          %s202 = scalar_lea.vmem [#allocation2], %s201
          %s203 = smul.u32 8, %s25
          %s205 = ssub.s32 512, 512
          %206 = vsyncadd %s199, %s205
          %s207 = smul.addr %s24, 8
          %s208 = sadd.s32 %s203, %s207
          %s209 = smul.addr %s208, 64
          %s210 = scalar_lea.hbm %s0, %s209
          %s211 = sshll.u32 %s202, 4
          %s212 = int_to_ptr.vmem [resolvable:$true] %s211
          %217 = dma.hbm_to_vmem [thread:$0]  %s210, 512, %s212, %s199, 64, 64, 4
        $region32: #{tpu_custom_call.1} parent=27 // pred_fallthru
          _
      $region28: #{tpu_custom_call.1} parent=5 // pred_fallthru
        _
      %p218 = scmp.le.s32.totalorder 1, %s17
      %p219 = scmp.lt.s32.totalorder %s17, 5
      %p220 = pnand %p218, %p219
      %p221 = pneg %p220
      // Predicated region
      $region33: #{tpu_custom_call.1} parent=5 // pred_check
        _
      $region34: #{tpu_custom_call.1} parent=5 // pred_check_branch
        %223 = sbr.rel (%p220) target = $region36
      $region35: #{tpu_custom_call.1} parent=5 // pred_region
        %s224 = ssub.s32 %s17, 1
        %s225 = sand.u32 %s51, 1
        %s226 = scalar_lea.sflag [#allocation3], %s225
        %s227 = sand.u32 %s51, 1
        %s228 = smul.addr %s227, 32
        %s229 = scalar_lea.vmem [#allocation2], %s228
        // Predicated region
        $region37: #{tpu_custom_call.1} parent=35 // pred_check
          %p230 = pneg %p64
        $region38: #{tpu_custom_call.1} parent=35 // pred_check_branch
          %232 = sbr.rel (%p230) target = $region40
        $region39: #{tpu_custom_call.1} parent=35 // pred_region
          %233 = dma.done %s226, 512
        $region40: #{tpu_custom_call.1} parent=35 // pred_fallthru
          _
        // Predicated region
        $region41: #{tpu_custom_call.1} parent=35 // pred_check
          %p234 = pneg %p85
        $region42: #{tpu_custom_call.1} parent=35 // pred_check_branch
          %236 = sbr.rel (%p234) target = $region44
        $region43: #{tpu_custom_call.1} parent=35 // pred_region
          %237 = dma.done [#allocation6], 1024
        $region44: #{tpu_custom_call.1} parent=35 // pred_fallthru
          _
        %s238 = sand.u32 %s51, 1
        %s239 = scalar_lea.sflag [#allocation3], %s238
        %s240 = sand.u32 %s51, 1
        %s241 = smul.addr %s240, 32
        %s242 = scalar_lea.vmem [#allocation2], %s241
        %p243 = pneg %p64
        %p244 = pneg %p61
        %p245 = pneg %p85
        %p246 = pneg %p82
        %p247 = pneg %p106
        %p248 = pneg %p103
        %p249 = pneg %p127
        %p250 = pneg %p124
        %p251 = pneg %p157
        %p252 = pneg %p154
        %s253 = sand.u32 %s144, 1
        %s254 = scalar_lea.sflag [#allocation4], %s253
        %s255 = sand.u32 %s144, 1
        %s256 = smul.addr %s255, 32
        %s257 = scalar_lea.vmem [#allocation7], %s256
        %s258 = smul.u32 8, %s28
        %s259 = smul.u32 8, %s28
        %v261 = vld [vmem:[%s229] sm:$0xf]
        %v262 = vld [vmem:[%s229 + $0x4] sm:$0xf]
        %v263 = vld [vmem:[%s229 + $0x8] sm:$0xf]
        %v264 = vld [vmem:[%s229 + $0xc] sm:$0xf]
        %v265 = vld [vmem:[%s229 + $0x10] sm:$0xf]
        %v266 = vld [vmem:[%s229 + $0x14] sm:$0xf]
        %v267 = vld [vmem:[%s229 + $0x18] sm:$0xf]
        %v268 = vld [vmem:[%s229 + $0x1c] sm:$0xf]
        %s269 = smul.u32 %s29, 8
        %s270 = smul.addr %s269, 4
        %s271 = scalar_lea.vmem [#allocation5], %s270
        %v272 = vld [vmem:[%s271] sm:$0xf]
        %v273 = vld [vmem:[%s271 + $0x4] sm:$0xf]
        %v274 = vld [vmem:[%s271 + $0x8] sm:$0xf]
        %v275 = vld [vmem:[%s271 + $0xc] sm:$0xf]
        %v276 = vld [vmem:[%s271 + $0x10] sm:$0xf]
        %v277 = vld [vmem:[%s271 + $0x14] sm:$0xf]
        %v278 = vld [vmem:[%s271 + $0x18] sm:$0xf]
        %v279 = vld [vmem:[%s271 + $0x1c] sm:$0xf]
        %v288 = vunpack.c.l.b16 %v261
        %v289 = vunpack.c.l.b16 %v262
        %v290 = vunpack.c.l.b16 %v263
        %v291 = vunpack.c.l.b16 %v264
        %v292 = vunpack.c.l.b16 %v265
        %v293 = vunpack.c.l.b16 %v266
        %v294 = vunpack.c.l.b16 %v267
        %v295 = vunpack.c.l.b16 %v268
        %v296 = vpack.c.b16 %v289, %v288
        %v297 = vpack.c.b16 %v291, %v290
        %v298 = vpack.c.b16 %v293, %v292
        %v299 = vpack.c.b16 %v295, %v294
        %v308 = vunpack.c.l.b16 %v272
        %v309 = vunpack.c.l.b16 %v273
        %v310 = vunpack.c.l.b16 %v274
        %v311 = vunpack.c.l.b16 %v275
        %v312 = vunpack.c.l.b16 %v276
        %v313 = vunpack.c.l.b16 %v277
        %v314 = vunpack.c.l.b16 %v278
        %v315 = vunpack.c.l.b16 %v279
        %v316 = vpack.c.b16 %v309, %v308
        %v317 = vpack.c.b16 %v311, %v310
        %v318 = vpack.c.b16 %v313, %v312
        %v319 = vpack.c.b16 %v315, %v314
        %vm324 = vcmask 523264
        %v326 = vsel %vm324, %v296, 0
        %v329 = vsel %vm324, %v297, 0
        %v332 = vsel %vm324, %v298, 0
        %v335 = vsel %vm324, %v299, 0
        %337 = vmatprep.subr.bf16.mxu0 0
        %338 = vmatpush1.bf16.msra.mxu0 0
        %339 = vmatprep.subr.bf16.mxu0 0
        %340 = vmatpush1.bf16.msra.mxu0 0
        %341 = vmatprep.subr.bf16.mxu0 0
        %342 = vmatpush1.bf16.msra.mxu0 0
        %343 = vmatprep.subr.bf16.mxu0 0
        %344 = vmatpush1.bf16.msra.mxu0 0
        %345 = vmatprep.subr.bf16.mxu0 0
        %346 = vmatpush1.bf16.msra.mxu0 %v319
        %347 = vmatprep.subr.bf16.mxu0 0
        %348 = vmatpush1.bf16.msra.mxu0 %v318
        %349 = vmatprep.subr.bf16.mxu0 0
        %350 = vmatpush1.bf16.msra.mxu0 %v317
        %351 = vmatprep.subr.bf16.mxu0 0
        %352 = vmatpush1.bf16.msra.mxu0 %v316
        %353 = vmatprep.subr.bf16.mxu0 0
        %354 = vmatpush2.bf16.msra.mxu0 0
        %355 = vmatprep.subr.bf16.mxu0 0
        %356 = vmatpush2.bf16.msra.mxu0 0
        %357 = vmatprep.subr.bf16.mxu0 0
        %358 = vmatpush2.bf16.msra.mxu0 0
        %359 = vmatprep.subr.bf16.mxu0 0
        %360 = vmatpush2.bf16.msra.mxu0 0
        %361 = vmatprep.subr.bf16.mxu0 0
        %362 = vmatpush2.bf16.msra.mxu0 0
        %363 = vmatprep.subr.bf16.mxu0 0
        %364 = vmatpush2.bf16.msra.mxu0 0
        %365 = vmatprep.subr.bf16.mxu0 0
        %366 = vmatpush2.bf16.msra.mxu0 0
        %367 = vmatprep.subr.bf16.mxu0 0
        %368 = vmatpush2.bf16.msra.mxu0 0
        %369 = vmatprep.mubr.bf16.mxu0 0
        %370 = vmatmul.mubr.bf16.gmra.mxu0 %v326
        %v371 = vpop.f32.mrf.mxu0
        %v372 = vadd.f32 0.0, %v371
        %v373 = vpop.f32.mrf.mxu0
        %v374 = vpop.f32.mrf.mxu0
        %v375 = vadd.f32 0.0, %v374
        %v376 = vpop.f32.mrf.mxu0
        %377 = vmatprep.mubr.bf16.mxu0 0
        %378 = vmatmul.mubr.bf16.gmra.mxu0 %v329
        %v379 = vpop.f32.mrf.mxu0
        %v380 = vadd.f32 0.0, %v379
        %v381 = vpop.f32.mrf.mxu0
        %v382 = vpop.f32.mrf.mxu0
        %v383 = vadd.f32 0.0, %v382
        %v384 = vpop.f32.mrf.mxu0
        %385 = vmatprep.mubr.bf16.mxu0 0
        %386 = vmatmul.mubr.bf16.gmra.mxu0 %v332
        %v387 = vpop.f32.mrf.mxu0
        %v388 = vadd.f32 0.0, %v387
        %v389 = vpop.f32.mrf.mxu0
        %v390 = vpop.f32.mrf.mxu0
        %v391 = vadd.f32 0.0, %v390
        %v392 = vpop.f32.mrf.mxu0
        %393 = vmatprep.mubr.bf16.mxu0 0
        %394 = vmatmul.mubr.bf16.gmra.mxu0 %v335
        %v395 = vpop.f32.mrf.mxu0
        %v396 = vadd.f32 0.0, %v395
        %v397 = vpop.f32.mrf.mxu0
        %v398 = vpop.f32.mrf.mxu0
        %v399 = vadd.f32 0.0, %v398
        %v400 = vpop.f32.mrf.mxu0
        %401 = vdwg.mxu0
        %v402 = vlaneseq
        %v403 = vand.u32 %v402, 127
        %vm404 = vcmp.lt.s32.totalorder %v403, 32
        %v405 = vsel %vm404, 1, 0
        %v406 = vcvt.s32.f32 %v405
        %v407 = vmul.f32 %v372, %v372
        %v408 = vmul.f32 %v375, %v375
        %v409 = vmul.f32 %v380, %v380
        %v410 = vmul.f32 %v383, %v383
        %v411 = vmul.f32 %v388, %v388
        %v412 = vmul.f32 %v391, %v391
        %v413 = vmul.f32 %v396, %v396
        %v414 = vmul.f32 %v399, %v399
        %v415 = vsel %vm324, %v372, 0.0
        %416 = vadd.xlane.f32.xlu0 %v415
        %v417 = vpop.xlane.xlu0 %416
        %v418 = vsel %vm324, %v375, 0.0
        %419 = vadd.xlane.f32.xlu0 %v418
        %v420 = vpop.xlane.xlu0 %419
        %v421 = vsel %vm324, %v380, 0.0
        %422 = vadd.xlane.f32.xlu0 %v421
        %v423 = vpop.xlane.xlu0 %422
        %v424 = vsel %vm324, %v383, 0.0
        %425 = vadd.xlane.f32.xlu0 %v424
        %v426 = vpop.xlane.xlu0 %425
        %v427 = vsel %vm324, %v388, 0.0
        %428 = vadd.xlane.f32.xlu0 %v427
        %v429 = vpop.xlane.xlu0 %428
        %v430 = vsel %vm324, %v391, 0.0
        %431 = vadd.xlane.f32.xlu0 %v430
        %v432 = vpop.xlane.xlu0 %431
        %v433 = vsel %vm324, %v396, 0.0
        %434 = vadd.xlane.f32.xlu0 %v433
        %v435 = vpop.xlane.xlu0 %434
        %v436 = vsel %vm324, %v399, 0.0
        %437 = vadd.xlane.f32.xlu0 %v436
        %v438 = vpop.xlane.xlu0 %437
        %v439 = vmul.f32 %v372, %v406
        %v440 = vmul.f32 %v375, %v406
        %v441 = vmul.f32 %v380, %v406
        %v442 = vmul.f32 %v383, %v406
        %v443 = vmul.f32 %v388, %v406
        %v444 = vmul.f32 %v391, %v406
        %v445 = vmul.f32 %v396, %v406
        %v446 = vmul.f32 %v399, %v406
        %v447 = vsel %vm324, %v439, 0.0
        %448 = vadd.xlane.f32.xlu0 %v447
        %v449 = vpop.xlane.xlu0 %448
        %v450 = vsel %vm324, %v440, 0.0
        %451 = vadd.xlane.f32.xlu0 %v450
        %v452 = vpop.xlane.xlu0 %451
        %v453 = vsel %vm324, %v441, 0.0
        %454 = vadd.xlane.f32.xlu0 %v453
        %v455 = vpop.xlane.xlu0 %454
        %v456 = vsel %vm324, %v442, 0.0
        %457 = vadd.xlane.f32.xlu0 %v456
        %v458 = vpop.xlane.xlu0 %457
        %v459 = vsel %vm324, %v443, 0.0
        %460 = vadd.xlane.f32.xlu0 %v459
        %v461 = vpop.xlane.xlu0 %460
        %v462 = vsel %vm324, %v444, 0.0
        %463 = vadd.xlane.f32.xlu0 %v462
        %v464 = vpop.xlane.xlu0 %463
        %v465 = vsel %vm324, %v445, 0.0
        %466 = vadd.xlane.f32.xlu0 %v465
        %v467 = vpop.xlane.xlu0 %466
        %v468 = vsel %vm324, %v446, 0.0
        %469 = vadd.xlane.f32.xlu0 %v468
        %v470 = vpop.xlane.xlu0 %469
        %v471 = vsel %vm324, %v407, 0.0
        %472 = vadd.xlane.f32.xlu0 %v471
        %v473 = vpop.xlane.xlu0 %472
        %v474 = vsel %vm324, %v408, 0.0
        %475 = vadd.xlane.f32.xlu0 %v474
        %v476 = vpop.xlane.xlu0 %475
        %v477 = vsel %vm324, %v409, 0.0
        %478 = vadd.xlane.f32.xlu0 %v477
        %v479 = vpop.xlane.xlu0 %478
        %v480 = vsel %vm324, %v410, 0.0
        %481 = vadd.xlane.f32.xlu0 %v480
        %v482 = vpop.xlane.xlu0 %481
        %v483 = vsel %vm324, %v411, 0.0
        %484 = vadd.xlane.f32.xlu0 %v483
        %v485 = vpop.xlane.xlu0 %484
        %v486 = vsel %vm324, %v412, 0.0
        %487 = vadd.xlane.f32.xlu0 %v486
        %v488 = vpop.xlane.xlu0 %487
        %v489 = vsel %vm324, %v413, 0.0
        %490 = vadd.xlane.f32.xlu0 %v489
        %v491 = vpop.xlane.xlu0 %490
        %v492 = vsel %vm324, %v414, 0.0
        %493 = vadd.xlane.f32.xlu0 %v492
        %v494 = vpop.xlane.xlu0 %493
        %v495 = vmul.f32 %v407, %v406
        %v496 = vmul.f32 %v408, %v406
        %v497 = vmul.f32 %v409, %v406
        %v498 = vmul.f32 %v410, %v406
        %v499 = vmul.f32 %v411, %v406
        %v500 = vmul.f32 %v412, %v406
        %v501 = vmul.f32 %v413, %v406
        %v502 = vmul.f32 %v414, %v406
        %v503 = vsel %vm324, %v495, 0.0
        %504 = vadd.xlane.f32.xlu0 %v503
        %v505 = vpop.xlane.xlu0 %504
        %v506 = vsel %vm324, %v496, 0.0
        %507 = vadd.xlane.f32.xlu0 %v506
        %v508 = vpop.xlane.xlu0 %507
        %v509 = vsel %vm324, %v497, 0.0
        %510 = vadd.xlane.f32.xlu0 %v509
        %v511 = vpop.xlane.xlu0 %510
        %v512 = vsel %vm324, %v498, 0.0
        %513 = vadd.xlane.f32.xlu0 %v512
        %v514 = vpop.xlane.xlu0 %513
        %v515 = vsel %vm324, %v499, 0.0
        %516 = vadd.xlane.f32.xlu0 %v515
        %v517 = vpop.xlane.xlu0 %516
        %v518 = vsel %vm324, %v500, 0.0
        %519 = vadd.xlane.f32.xlu0 %v518
        %v520 = vpop.xlane.xlu0 %519
        %v521 = vsel %vm324, %v501, 0.0
        %522 = vadd.xlane.f32.xlu0 %v521
        %v523 = vpop.xlane.xlu0 %522
        %v524 = vsel %vm324, %v502, 0.0
        %525 = vadd.xlane.f32.xlu0 %v524
        %v526 = vpop.xlane.xlu0 %525
        %v527 = vmul.f32 %v449, 0.03125
        %v528 = vmul.f32 %v452, 0.03125
        %v529 = vmul.f32 %v455, 0.03125
        %v530 = vmul.f32 %v458, 0.03125
        %v531 = vmul.f32 %v461, 0.03125
        %v532 = vmul.f32 %v464, 0.03125
        %v533 = vmul.f32 %v467, 0.03125
        %v534 = vmul.f32 %v470, 0.03125
        %v535 = vsub.f32 %v417, %v449
        %v536 = vsub.f32 %v420, %v452
        %v537 = vsub.f32 %v423, %v455
        %v538 = vsub.f32 %v426, %v458
        %v539 = vsub.f32 %v429, %v461
        %v540 = vsub.f32 %v432, %v464
        %v541 = vsub.f32 %v435, %v467
        %v542 = vsub.f32 %v438, %v470
        %v543 = vmul.f32 %v535, 0.03125
        %v544 = vmul.f32 %v536, 0.03125
        %v545 = vmul.f32 %v537, 0.03125
        %v546 = vmul.f32 %v538, 0.03125
        %v547 = vmul.f32 %v539, 0.03125
        %v548 = vmul.f32 %v540, 0.03125
        %v549 = vmul.f32 %v541, 0.03125
        %v550 = vmul.f32 %v542, 0.03125
        %v551 = vmul.f32 %v505, 0.03125
        %v552 = vmul.f32 %v508, 0.03125
        %v553 = vmul.f32 %v511, 0.03125
        %v554 = vmul.f32 %v514, 0.03125
        %v555 = vmul.f32 %v517, 0.03125
        %v556 = vmul.f32 %v520, 0.03125
        %v557 = vmul.f32 %v523, 0.03125
        %v558 = vmul.f32 %v526, 0.03125
        %v559 = vmul.f32 %v527, %v527
        %v560 = vmul.f32 %v528, %v528
        %v561 = vmul.f32 %v529, %v529
        %v562 = vmul.f32 %v530, %v530
        %v563 = vmul.f32 %v531, %v531
        %v564 = vmul.f32 %v532, %v532
        %v565 = vmul.f32 %v533, %v533
        %v566 = vmul.f32 %v534, %v534
        %v567 = vsub.f32 %v551, %v559
        %v568 = vsub.f32 %v552, %v560
        %v569 = vsub.f32 %v553, %v561
        %v570 = vsub.f32 %v554, %v562
        %v571 = vsub.f32 %v555, %v563
        %v572 = vsub.f32 %v556, %v564
        %v573 = vsub.f32 %v557, %v565
        %v574 = vsub.f32 %v558, %v566
        %v575 = vsub.f32 %v473, %v505
        %v576 = vsub.f32 %v476, %v508
        %v577 = vsub.f32 %v479, %v511
        %v578 = vsub.f32 %v482, %v514
        %v579 = vsub.f32 %v485, %v517
        %v580 = vsub.f32 %v488, %v520
        %v581 = vsub.f32 %v491, %v523
        %v582 = vsub.f32 %v494, %v526
        %v583 = vmul.f32 %v575, 0.03125
        %v584 = vmul.f32 %v576, 0.03125
        %v585 = vmul.f32 %v577, 0.03125
        %v586 = vmul.f32 %v578, 0.03125
        %v587 = vmul.f32 %v579, 0.03125
        %v588 = vmul.f32 %v580, 0.03125
        %v589 = vmul.f32 %v581, 0.03125
        %v590 = vmul.f32 %v582, 0.03125
        %v591 = vmul.f32 %v543, %v543
        %v592 = vmul.f32 %v544, %v544
        %v593 = vmul.f32 %v545, %v545
        %v594 = vmul.f32 %v546, %v546
        %v595 = vmul.f32 %v547, %v547
        %v596 = vmul.f32 %v548, %v548
        %v597 = vmul.f32 %v549, %v549
        %v598 = vmul.f32 %v550, %v550
        %v599 = vsub.f32 %v583, %v591
        %v600 = vsub.f32 %v584, %v592
        %v601 = vsub.f32 %v585, %v593
        %v602 = vsub.f32 %v586, %v594
        %v603 = vsub.f32 %v587, %v595
        %v604 = vsub.f32 %v588, %v596
        %v605 = vsub.f32 %v589, %v597
        %v606 = vsub.f32 %v590, %v598
        %v607 = vadd.f32 %v567, 1e-05
        %v608 = vadd.f32 %v568, 1e-05
        %v609 = vadd.f32 %v569, 1e-05
        %v610 = vadd.f32 %v570, 1e-05
        %v611 = vadd.f32 %v571, 1e-05
        %v612 = vadd.f32 %v572, 1e-05
        %v613 = vadd.f32 %v573, 1e-05
        %v614 = vadd.f32 %v574, 1e-05
        %v615 = vrsqrt.pop %v607
        %v616 = vrsqrt.pop %v608
        %v617 = vrsqrt.pop %v609
        %v618 = vrsqrt.pop %v610
        %v619 = vrsqrt.pop %v611
        %v620 = vrsqrt.pop %v612
        %v621 = vrsqrt.pop %v613
        %v622 = vrsqrt.pop %v614
        %v623 = vadd.f32 %v599, 1e-05
        %v624 = vadd.f32 %v600, 1e-05
        %v625 = vadd.f32 %v601, 1e-05
        %v626 = vadd.f32 %v602, 1e-05
        %v627 = vadd.f32 %v603, 1e-05
        %v628 = vadd.f32 %v604, 1e-05
        %v629 = vadd.f32 %v605, 1e-05
        %v630 = vadd.f32 %v606, 1e-05
        %v631 = vrsqrt.pop %v623
        %v632 = vrsqrt.pop %v624
        %v633 = vrsqrt.pop %v625
        %v634 = vrsqrt.pop %v626
        %v635 = vrsqrt.pop %v627
        %v636 = vrsqrt.pop %v628
        %v637 = vrsqrt.pop %v629
        %v638 = vrsqrt.pop %v630
        %v639 = vsub.f32 %v527, %v543
        %v640 = vsub.f32 %v528, %v544
        %v641 = vsub.f32 %v529, %v545
        %v642 = vsub.f32 %v530, %v546
        %v643 = vsub.f32 %v531, %v547
        %v644 = vsub.f32 %v532, %v548
        %v645 = vsub.f32 %v533, %v549
        %v646 = vsub.f32 %v534, %v550
        %v647 = vmul.f32 %v639, %v406
        %v648 = vmul.f32 %v640, %v406
        %v649 = vmul.f32 %v641, %v406
        %v650 = vmul.f32 %v642, %v406
        %v651 = vmul.f32 %v643, %v406
        %v652 = vmul.f32 %v644, %v406
        %v653 = vmul.f32 %v645, %v406
        %v654 = vmul.f32 %v646, %v406
        %v655 = vadd.f32 %v543, %v647
        %v656 = vadd.f32 %v544, %v648
        %v657 = vadd.f32 %v545, %v649
        %v658 = vadd.f32 %v546, %v650
        %v659 = vadd.f32 %v547, %v651
        %v660 = vadd.f32 %v548, %v652
        %v661 = vadd.f32 %v549, %v653
        %v662 = vadd.f32 %v550, %v654
        %v663 = vsub.f32 %v615, %v631
        %v664 = vsub.f32 %v616, %v632
        %v665 = vsub.f32 %v617, %v633
        %v666 = vsub.f32 %v618, %v634
        %v667 = vsub.f32 %v619, %v635
        %v668 = vsub.f32 %v620, %v636
        %v669 = vsub.f32 %v621, %v637
        %v670 = vsub.f32 %v622, %v638
        %v671 = vmul.f32 %v663, %v406
        %v672 = vmul.f32 %v664, %v406
        %v673 = vmul.f32 %v665, %v406
        %v674 = vmul.f32 %v666, %v406
        %v675 = vmul.f32 %v667, %v406
        %v676 = vmul.f32 %v668, %v406
        %v677 = vmul.f32 %v669, %v406
        %v678 = vmul.f32 %v670, %v406
        %v679 = vadd.f32 %v631, %v671
        %v680 = vadd.f32 %v632, %v672
        %v681 = vadd.f32 %v633, %v673
        %v682 = vadd.f32 %v634, %v674
        %v683 = vadd.f32 %v635, %v675
        %v684 = vadd.f32 %v636, %v676
        %v685 = vadd.f32 %v637, %v677
        %v686 = vadd.f32 %v638, %v678
        %v687 = vld [vmem:[%s2] sm:$0x1]
        %v689 = vlaneseq
        %v690 = vshrl.u32 %v689, 7
        %v691 = vsub.s32 0, %v690
        %v692 = vrot.slane %v687, %v691
        %v694 = vmul.f32 %v679, %v692
        %v695 = vmul.f32 %v680, %v692
        %v696 = vmul.f32 %v681, %v692
        %v697 = vmul.f32 %v682, %v692
        %v698 = vmul.f32 %v683, %v692
        %v699 = vmul.f32 %v684, %v692
        %v700 = vmul.f32 %v685, %v692
        %v701 = vmul.f32 %v686, %v692
        %v702 = vsub.f32 %v372, %v655
        %v703 = vsub.f32 %v375, %v656
        %v704 = vsub.f32 %v380, %v657
        %v705 = vsub.f32 %v383, %v658
        %v706 = vsub.f32 %v388, %v659
        %v707 = vsub.f32 %v391, %v660
        %v708 = vsub.f32 %v396, %v661
        %v709 = vsub.f32 %v399, %v662
        %v710 = vmul.f32 %v702, %v694
        %v711 = vmul.f32 %v703, %v695
        %v712 = vmul.f32 %v704, %v696
        %v713 = vmul.f32 %v705, %v697
        %v714 = vmul.f32 %v706, %v698
        %v715 = vmul.f32 %v707, %v699
        %v716 = vmul.f32 %v708, %v700
        %v717 = vmul.f32 %v709, %v701
        %v718 = vld [vmem:[%s3] sm:$0x1]
        %v720 = vlaneseq
        %v721 = vshrl.u32 %v720, 7
        %v722 = vsub.s32 0, %v721
        %v723 = vrot.slane %v718, %v722
        %v725 = vadd.f32 %v710, %v723
        %v726 = vadd.f32 %v711, %v723
        %v727 = vadd.f32 %v712, %v723
        %v728 = vadd.f32 %v713, %v723
        %v729 = vadd.f32 %v714, %v723
        %v730 = vadd.f32 %v715, %v723
        %v731 = vadd.f32 %v716, %v723
        %v732 = vadd.f32 %v717, %v723
        %v733 = vpack.c.bf16 %v725, %v725
        %v734 = vpack.c.bf16 %v726, %v726
        %v735 = vpack.c.bf16 %v727, %v727
        %v736 = vpack.c.bf16 %v728, %v728
        %v737 = vpack.c.bf16 %v729, %v729
        %v738 = vpack.c.bf16 %v730, %v730
        %v739 = vpack.c.bf16 %v731, %v731
        %v740 = vpack.c.bf16 %v732, %v732
        %vm741 = vcmask 519168
        %742 = vst.msk [vmem:[%s257] sm:$0xf] %vm741, %v733
        %743 = vst.msk [vmem:[%s257 + $0x4] sm:$0xf] %vm741, %v734
        %744 = vst.msk [vmem:[%s257 + $0x8] sm:$0xf] %vm741, %v735
        %745 = vst.msk [vmem:[%s257 + $0xc] sm:$0xf] %vm741, %v736
        %746 = vst.msk [vmem:[%s257 + $0x10] sm:$0xf] %vm741, %v737
        %747 = vst.msk [vmem:[%s257 + $0x14] sm:$0xf] %vm741, %v738
        %748 = vst.msk [vmem:[%s257 + $0x18] sm:$0xf] %vm741, %v739
        %749 = vst.msk [vmem:[%s257 + $0x1c] sm:$0xf] %vm741, %v740
        %s750 = sand.u32 %s144, 1
        %s751 = scalar_lea.sflag [#allocation4], %s750
        %s752 = sand.u32 %s144, 1
        %s753 = smul.addr %s752, 32
        %s754 = scalar_lea.vmem [#allocation7], %s753
        // Predicated region
        $region45: #{tpu_custom_call.1} parent=35 // pred_check
          %p755 = pneg %p154
        $region46: #{tpu_custom_call.1} parent=35 // pred_check_branch
          %757 = sbr.rel (%p755) target = $region48
        $region47: #{tpu_custom_call.1} parent=35 // pred_region
          %s758 = smul.u32 8, %s28
          %s760 = ssub.s32 512, 512
          %761 = vsyncadd %s751, %s760
          %s762 = smul.addr %s758, 2
          %s763 = sadd.s32 %s29, %s762
          %s764 = smul.addr %s27, 16
          %s765 = sadd.s32 %s763, %s764
          %s766 = smul.addr %s765, 64
          %s767 = scalar_lea.hbm %s4, %s766
          %s768 = sshll.u32 %s754, 4
          %s769 = int_to_ptr.vmem [resolvable:$true] %s768
          %774 = dma.vmem_to_hbm [thread:$0]  %s769, 512, %s767, %s751, 64, 128, 4
        $region48: #{tpu_custom_call.1} parent=35 // pred_fallthru
          _
      $region36: #{tpu_custom_call.1} parent=5 // pred_fallthru
        _
      %p775 = scmp.le.s32.totalorder 2, %s17
      // Predicated region
      $region49: #{tpu_custom_call.1} parent=5 // pred_check
        %p776 = pneg %p775
      $region50: #{tpu_custom_call.1} parent=5 // pred_check_branch
        %778 = sbr.rel (%p776) target = $region52
      $region51: #{tpu_custom_call.1} parent=5 // pred_region
        %s779 = ssub.s32 %s17, 2
        // Predicated region
        $region53: #{tpu_custom_call.1} parent=51 // pred_check
          %p780 = pneg %p160
        $region54: #{tpu_custom_call.1} parent=51 // pred_check_branch
          %782 = sbr.rel (%p780) target = $region56
        $region55: #{tpu_custom_call.1} parent=51 // pred_region
          %s783 = sand.u32 %s145, 1
          %s784 = scalar_lea.sflag [#allocation4], %s783
          %s785 = sand.u32 %s145, 1
          %s786 = smul.addr %s785, 32
          %s787 = scalar_lea.vmem [#allocation7], %s786
          %788 = dma.done %s784, 512
        $region56: #{tpu_custom_call.1} parent=51 // pred_fallthru
          _
      $region52: #{tpu_custom_call.1} parent=5 // pred_fallthru
        _
    $region6: #{tpu_custom_call.1} parent=1 // loop_footer
      %s21 = sadd.s32 1, %s17
    $region7: #{tpu_custom_call.1} parent=1 // loop_footer_branch
      %16 = sbr.rel target = $region3
    $region8: #{tpu_custom_call.1} parent=1 // loop_exit
      _
    %789 = vsyncpa [#allocation3], 1
    %s790 = scalar_lea.sflag [#allocation3], 1
    %791 = vsyncpa %s790, 1
    %792 = vsyncpa [#allocation6], 1
    %793 = vsyncpa [#allocation4], 1
    %s794 = scalar_lea.sflag [#allocation4], 1
    %795 = vsyncpa %s794, 1

</llo_original>
